<compile_context>
chip_gen: v5e
topology: v5e:2x2
jax: 0.10.0
libtpu: 0.0.40
codegen_flags: <defaults>
</compile_context>

<pallas_src>
import functools
import math

import jax
import jax.numpy as jnp
from jax import lax
from jax.experimental import pallas as pl
from jax.experimental.pallas import tpu as pltpu


# --------------------------------------------------------------------------
# Fused single-pass kernel (whole image(s) resident in the block).
# --------------------------------------------------------------------------
def _grn_fused_kernel(x_ref, gamma_ref, beta_ref, o_ref, *, channels, r_chunk):
    """x_ref/o_ref: (nb, R, L) with L = k*channels (lane index = m*C + c).
    gamma_ref/beta_ref: (1, L) per-channel params tiled k times along lanes."""
    nb, R, L = x_ref.shape

    g = gamma_ref[...].astype(jnp.float32)        # (1, L)
    b = beta_ref[...].astype(jnp.float32)         # (1, L)

    n_main = R // r_chunk
    tail = R - n_main * r_chunk

    # ---- Phase 1: per-lane sum of squares, chunked over the R (sublane) axis
    # so the f32 upcast never holds more than one chunk of live vregs.
    def _ss_chunk(r0, size):
        xc = x_ref[:, pl.ds(r0, size), :].astype(jnp.float32)
        return jnp.sum(xc * xc, axis=1)           # (nb, L)

    def _ss_body(i, acc):
        r0 = pl.multiple_of(i * r_chunk, r_chunk)
        return acc + _ss_chunk(r0, r_chunk)

    ss = lax.fori_loop(0, n_main, _ss_body, jnp.zeros((nb, L), jnp.float32))
    if tail:
        ss = ss + _ss_chunk(n_main * r_chunk, tail)

    # Fold the k lane groups with a roll tree (XLU slot): afterwards every
    # group of `channels` lanes holds the full per-channel sum of squares.
    shift = L // 2
    while shift >= channels:
        ss = ss + pltpu.roll(ss, shift, axis=1)
        shift //= 2

    gx = jnp.sqrt(ss)                                           # (nb, L)
    # Mean over the replicated lane axis == mean over the C channels.
    inv = 1.0 / (jnp.mean(gx, axis=-1, keepdims=True) + 1e-6)   # (nb, 1)
    # y = gamma*(x*Nx) + beta + x  ==  x * (gamma*Nx + 1) + beta
    a = (g * (gx * inv) + 1.0)[:, None, :]                      # (nb, 1, L)
    bias = b[:, None, :]                                        # (1, 1, L)

    # ---- Phase 2: apply.  Re-read x_ref per chunk (VMEM vld is cheap) so the
    # pre-reduction value is never kept live across the whole block.
    def _apply_chunk(r0, size):
        xc = x_ref[:, pl.ds(r0, size), :].astype(jnp.float32)
        o_ref[:, pl.ds(r0, size), :] = (xc * a + bias).astype(o_ref.dtype)

    def _apply_body(i, carry):
        r0 = pl.multiple_of(i * r_chunk, r_chunk)
        _apply_chunk(r0, r_chunk)
        return carry

    lax.fori_loop(0, n_main, _apply_body, jnp.int32(0))
    if tail:
        _apply_chunk(n_main * r_chunk, tail)


# --------------------------------------------------------------------------
# Two-pass (spatially tiled) kernels for images larger than the block budget.
# --------------------------------------------------------------------------
def _grn_norm_kernel(x_ref, gamma_ref, scale_ref, *, channels):
    """Pass 1: accumulate sum-of-squares over R tiles, emit per-image scale
    a = gamma*Nx + 1.  scale_ref block (1, 1, L) is resident across the R axis."""
    j = pl.program_id(1)

    @pl.when(j == 0)
    def _init():
        scale_ref[...] = jnp.zeros_like(scale_ref)

    x = x_ref[...].astype(jnp.float32)                           # (1, rt, L)
    scale_ref[...] += jnp.sum(x * x, axis=1, keepdims=True)      # (1, 1, L)

    @pl.when(j == pl.num_programs(1) - 1)
    def _finalize():
        ss = scale_ref[...].reshape(1, -1)                       # (1, L)
        shift = ss.shape[-1] // 2
        while shift >= channels:
            ss = ss + pltpu.roll(ss, shift, axis=1)
            shift //= 2
        gx = jnp.sqrt(ss)
        inv = 1.0 / (jnp.mean(gx, axis=-1, keepdims=True) + 1e-6)
        g = gamma_ref[...].astype(jnp.float32)                   # (1, L)
        scale_ref[...] = (g * (gx * inv) + 1.0)[:, None, :]      # (1, 1, L)


def _grn_apply_kernel(x_ref, scale_ref, beta_ref, o_ref):
    """Pass 2: pure elementwise apply, y = x * a + beta."""
    x = x_ref[...].astype(jnp.float32)                           # (1, rt, L)
    a = scale_ref[...]                                           # (1, 1, L) f32
    b = beta_ref[...].astype(jnp.float32)                        # (1, L)
    o_ref[...] = (x * a + b[:, None, :]).astype(o_ref.dtype)


# --------------------------------------------------------------------------
# Wrapper.
# --------------------------------------------------------------------------
def _vmem_budget(max_block_bytes, vmem_limit_bytes):
    """Per-generation block / scoped-VMEM budget (v5e/v6e: 128 MiB physical
    VMEM -> 8 MiB blocks, 64 MiB limit; v7x: 64 MiB physical -> 4 MiB / 32 MiB)."""
    if max_block_bytes is not None and vmem_limit_bytes is not None:
        return max_block_bytes, vmem_limit_bytes
    cap = 64 * 1024 * 1024
    try:
        cap = int(pltpu.get_tpu_info().vmem_capacity_bytes)
    except Exception:
        pass  # conservative fallback (treat as v7x-sized VMEM)
    if cap >= 100 * 1024 * 1024:
        mb, vl = 8 * 1024 * 1024, 64 * 1024 * 1024
    else:
        mb, vl = 4 * 1024 * 1024, 32 * 1024 * 1024
    return (max_block_bytes if max_block_bytes is not None else mb,
            vmem_limit_bytes if vmem_limit_bytes is not None else vl)


def _grn_fused(xr, gam, bet, channels, max_block_bytes, vmem_limit_bytes):
    N, R, L = xr.shape
    itemsize = jnp.dtype(xr.dtype).itemsize
    bytes_per_image = R * L * itemsize

    # Images per grid step: as many as fit the block budget, but keep >= 2
    # grid steps when N >= 2 (so both v7x TensorCores get work) and prefer an
    # even step count for megacore balance.  The last block may be ragged.
    nb = max(1, min(N, max_block_bytes // max(1, bytes_per_image)))
    if N >= 2:
        nb = min(nb, (N + 1) // 2)
        steps = pl.cdiv(N, nb)
        if steps % 2 == 1 and nb > 1 and pl.cdiv(N, nb - 1) % 2 == 0:
            nb -= 1
    grid = (pl.cdiv(N, nb),)

    # In-kernel R-chunking: cap live f32 intermediates at ~512 KiB.
    r_chunk = max(1, min(R, (512 * 1024) // max(1, nb * L * 4)))

    kernel = functools.partial(_grn_fused_kernel, channels=channels,
                               r_chunk=r_chunk)
    return pl.pallas_call(
        kernel,
        out_shape=jax.ShapeDtypeStruct((N, R, L), xr.dtype),
        grid_spec=pltpu.PrefetchScalarGridSpec(
            num_scalar_prefetch=0,
            grid=grid,
            in_specs=[
                pl.BlockSpec((nb, R, L), lambda i: (i, 0, 0)),
                pl.BlockSpec((1, L), lambda i: (0, 0)),
                pl.BlockSpec((1, L), lambda i: (0, 0)),
            ],
            out_specs=pl.BlockSpec((nb, R, L), lambda i: (i, 0, 0)),
        ),
        compiler_params=pltpu.CompilerParams(
            dimension_semantics=("parallel",),
            vmem_limit_bytes=vmem_limit_bytes,
        ),
    )(xr, gam, bet)


def _grn_two_pass(xr, gam, bet, channels, max_block_bytes, vmem_limit_bytes):
    """Spatially-tiled path for images whose slab exceeds the block budget."""
    N, R, L = xr.shape
    itemsize = jnp.dtype(xr.dtype).itemsize

    # Rows per R tile: multiple of 8 (sublane), block <= max_block_bytes.
    rt = max(8, ((max_block_bytes // max(1, L * itemsize)) // 8) * 8)
    rt = min(rt, ((R + 7) // 8) * 8)
    R_pad = pl.cdiv(R, rt) * rt
    if R_pad != R:  # zero rows are neutral for the sum of squares
        xr = jnp.pad(xr, ((0, 0), (0, R_pad - R), (0, 0)))
    n_rt = R_pad // rt

    norm_kernel = functools.partial(_grn_norm_kernel, channels=channels)
    scale = pl.pallas_call(
        norm_kernel,
        out_shape=jax.ShapeDtypeStruct((N, 1, L), jnp.float32),
        grid_spec=pltpu.PrefetchScalarGridSpec(
            num_scalar_prefetch=0,
            grid=(N, n_rt),
            in_specs=[
                pl.BlockSpec((1, rt, L), lambda i, j: (i, j, 0)),
                pl.BlockSpec((1, L), lambda i, j: (0, 0)),
            ],
            out_specs=pl.BlockSpec((1, 1, L), lambda i, j: (i, 0, 0)),
        ),
        compiler_params=pltpu.CompilerParams(
            dimension_semantics=("parallel", "arbitrary"),
            vmem_limit_bytes=vmem_limit_bytes,
        ),
    )(xr, gam)

    out = pl.pallas_call(
        _grn_apply_kernel,
        out_shape=jax.ShapeDtypeStruct((N, R_pad, L), xr.dtype),
        grid_spec=pltpu.PrefetchScalarGridSpec(
            num_scalar_prefetch=0,
            grid=(N, n_rt),
            in_specs=[
                pl.BlockSpec((1, rt, L), lambda i, j: (i, j, 0)),
                pl.BlockSpec((1, 1, L), lambda i, j: (i, 0, 0)),
                pl.BlockSpec((1, L), lambda i, j: (0, 0)),
            ],
            out_specs=pl.BlockSpec((1, rt, L), lambda i, j: (i, j, 0)),
        ),
        compiler_params=pltpu.CompilerParams(
            dimension_semantics=("parallel", "parallel"),
            vmem_limit_bytes=vmem_limit_bytes,
        ),
    )(xr, scale, bet)

    if R_pad != R:
        out = out[:, :R, :]
    return out


def grn_pallas(x, gamma, beta, *, max_block_bytes=None, vmem_limit_bytes=None):
    """x: (N, H, W, C); gamma, beta: (1, 1, 1, C).  Returns (N, H, W, C)."""
    N, H, W, C = x.shape
    HW = H * W
    max_block_bytes, vmem_limit_bytes = _vmem_budget(max_block_bytes,
                                                     vmem_limit_bytes)

    # Lane-dense fold: k spatial positions per lane row so L = k*C is a
    # multiple of 128.  Never fall back to lane-sparse — pad HW if needed.
    k = 128 // math.gcd(C, 128)
    HW_pad = pl.cdiv(HW, k) * k
    L = k * C
    R = HW_pad // k

    xf = x.reshape(N, HW, C)
    if HW_pad != HW:
        xf = jnp.pad(xf, ((0, 0), (0, HW_pad - HW), (0, 0)))
    xr = xf.reshape(N, R, L)                      # contiguous reshape
    gam = jnp.tile(gamma.reshape(1, C), (1, k))   # (1, L)
    bet = jnp.tile(beta.reshape(1, C), (1, k))    # (1, L)

    itemsize = jnp.dtype(x.dtype).itemsize
    bytes_per_image = R * L * itemsize
    if bytes_per_image <= max_block_bytes:
        out = _grn_fused(xr, gam, bet, C, max_block_bytes, vmem_limit_bytes)
    else:
        out = _grn_two_pass(xr, gam, bet, C, max_block_bytes, vmem_limit_bytes)

    out = out.reshape(N, HW_pad, C)
    if HW_pad != HW:
        out = out[:, :HW, :]
    return out.reshape(N, H, W, C)


def grn_reference(x, gamma, beta):
    gx = jnp.sqrt(jnp.sum(x * x, axis=(1, 2), keepdims=True))
    nx = gx / (jnp.mean(gx, axis=-1, keepdims=True) + 1e-6)
    return gamma * (x * nx) + beta + x


if __name__ == "__main__":
    # Small shapes consistent with the module's NHWC forward.
    N, H, W, C = 2, 8, 8, 32

    key = jax.random.PRNGKey(0)
    kx, kg, kb = jax.random.split(key, 3)
    x = jax.random.normal(kx, (N, H, W, C), dtype=jnp.float32)
    # Module __init__ uses zeros for gamma/beta; use small deterministic
    # random values so the normalization path is exercised.
    gamma = 0.1 * jax.random.normal(kg, (1, 1, 1, C), dtype=jnp.float32)
    beta = 0.1 * jax.random.normal(kb, (1, 1, 1, C), dtype=jnp.float32)

    # Fast fused path.
    out = jax.block_until_ready(grn_pallas(x, gamma, beta))
    ref = grn_reference(x, gamma, beta)
    assert out.shape == (N, H, W, C)
    assert jnp.allclose(out, ref, atol=1e-5, rtol=1e-5), "fused path mismatch"

    # Spatially-tiled two-pass path (force a block budget smaller than one image).
    out2 = jax.block_until_ready(
        grn_pallas(x, gamma, beta, max_block_bytes=4096,
                   vmem_limit_bytes=32 * 1024 * 1024))
    assert jnp.allclose(out2, ref, atol=1e-5, rtol=1e-5), "two-pass mismatch"

    # Padded lane-dense layout (H*W not divisible by the fold factor k).
    x3 = jax.random.normal(kx, (2, 3, 5, C), dtype=jnp.float32)
    out3 = jax.block_until_ready(grn_pallas(x3, gamma, beta))
    assert jnp.allclose(out3, grn_reference(x3, gamma, beta),
                        atol=1e-5, rtol=1e-5), "padded path mismatch"

    print("KERNEL_OK")
</pallas_src>

<mosaic_0001>
module attributes {stable_mosaic.version = 11 : i64} {
  func.func @_grn_fused_kernel(%arg0: i32, %arg1: memref<1x16x128xf32, #tpu.memory_space<vmem>>, %arg2: memref<1x128xf32, #tpu.memory_space<vmem>>, %arg3: memref<1x128xf32, #tpu.memory_space<vmem>>, %arg4: memref<1x16x128xf32, #tpu.memory_space<vmem>>) attributes {dimension_semantics = [#tpu.dimension_semantics<parallel>], iteration_bounds = array<i64: 2>, scalar_prefetch = 0 : i64, scratch_operands = 0 : i64, tpu.core_type = #tpu.core_type<tc>, window_params = [{transform_indices = @transform_0, window_bounds = array<i64: 1, 16, 128>}, {pipeline_mode = #tpu.pipeline_mode<synchronous>, transform_indices = @transform_1, window_bounds = array<i64: 1, 128>}, {pipeline_mode = #tpu.pipeline_mode<synchronous>, transform_indices = @transform_2, window_bounds = array<i64: 1, 128>}, {transform_indices = @transform_3, window_bounds = array<i64: 1, 16, 128>}]} {
    %c0 = arith.constant 0 : index
    %c0_0 = arith.constant 0 : index
    %0 = vector.load %arg2[%c0, %c0_0] : memref<1x128xf32, #tpu.memory_space<vmem>>, vector<1x128xf32>
    %c0_1 = arith.constant 0 : index
    %c0_2 = arith.constant 0 : index
    %1 = vector.load %arg3[%c0_1, %c0_2] : memref<1x128xf32, #tpu.memory_space<vmem>>, vector<1x128xf32>
    %cst = arith.constant 0.000000e+00 : f32
    %2 = vector.broadcast %cst : f32 to vector<1x128xf32>
    %c0_i32 = arith.constant 0 : i32
    %c16_i32 = arith.constant 16 : i32
    %3 = arith.muli %c0_i32, %c16_i32 : i32
    %4 = tpu.assume_multiple %3, 16 : i32
    %c0_3 = arith.constant 0 : index
    %5 = arith.index_cast %4 : i32 to index
    %c0_4 = arith.constant 0 : index
    %6 = vector.load %arg1[%c0_3, %5, %c0_4] : memref<1x16x128xf32, #tpu.memory_space<vmem>>, vector<1x16x128xf32>
    %7 = arith.mulf %6, %6 : vector<1x16x128xf32>
    %cst_5 = arith.constant dense<0.000000e+00> : vector<1x128xf32>
    %8 = vector.multi_reduction <add>, %7, %cst_5 [1] : vector<1x16x128xf32> to vector<1x128xf32>
    %9 = arith.addf %2, %8 : vector<1x128xf32>
    %c1_i32 = arith.constant 1 : i32
    %c64_i32 = arith.constant 64 : i32
    %10 = tpu.dynamic_rotate %9 by %c64_i32 dim 1 : vector<1x128xf32>, i32 -> vector<1x128xf32>
    %11 = arith.addf %9, %10 : vector<1x128xf32>
    %c32_i32 = arith.constant 32 : i32
    %12 = tpu.dynamic_rotate %11 by %c32_i32 dim 1 : vector<1x128xf32>, i32 -> vector<1x128xf32>
    %13 = arith.addf %11, %12 : vector<1x128xf32>
    %14 = math.sqrt %13 : vector<1x128xf32>
    %cst_6 = arith.constant dense<0.000000e+00> : vector<1xf32>
    %15 = vector.multi_reduction <add>, %14, %cst_6 [1] : vector<1x128xf32> to vector<1xf32>
    %16 = vector.shape_cast %15 : vector<1xf32> to vector<1x1xf32>
    %cst_7 = arith.constant 1.280000e+02 : f32
    %17 = vector.broadcast %cst_7 : f32 to vector<1x1xf32>
    %18 = arith.divf %16, %17 : vector<1x1xf32>
    %cst_8 = arith.constant 9.99999997E-7 : f32
    %19 = vector.broadcast %cst_8 : f32 to vector<1x1xf32>
    %20 = arith.addf %18, %19 : vector<1x1xf32>
    %cst_9 = arith.constant 1.000000e+00 : f32
    %21 = vector.broadcast %cst_9 : f32 to vector<1x1xf32>
    %22 = arith.divf %21, %20 : vector<1x1xf32>
    %23 = vector.broadcast %22 : vector<1x1xf32> to vector<1x128xf32>
    %24 = arith.mulf %14, %23 : vector<1x128xf32>
    %25 = arith.mulf %0, %24 : vector<1x128xf32>
    %cst_10 = arith.constant 1.000000e+00 : f32
    %26 = vector.broadcast %cst_10 : f32 to vector<1x128xf32>
    %27 = arith.addf %25, %26 : vector<1x128xf32>
    %28 = vector.shape_cast %27 : vector<1x128xf32> to vector<1x1x128xf32>
    %29 = vector.shape_cast %1 : vector<1x128xf32> to vector<1x1x128xf32>
    %c0_i32_11 = arith.constant 0 : i32
    %c16_i32_12 = arith.constant 16 : i32
    %30 = arith.muli %c0_i32_11, %c16_i32_12 : i32
    %31 = tpu.assume_multiple %30, 16 : i32
    %c0_13 = arith.constant 0 : index
    %32 = arith.index_cast %31 : i32 to index
    %c0_14 = arith.constant 0 : index
    %33 = vector.load %arg1[%c0_13, %32, %c0_14] : memref<1x16x128xf32, #tpu.memory_space<vmem>>, vector<1x16x128xf32>
    %34 = vector.broadcast %28 : vector<1x1x128xf32> to vector<1x16x128xf32>
    %35 = arith.mulf %33, %34 : vector<1x16x128xf32>
    %36 = vector.broadcast %29 : vector<1x1x128xf32> to vector<1x16x128xf32>
    %37 = arith.addf %35, %36 : vector<1x16x128xf32>
    %c0_15 = arith.constant 0 : index
    %38 = arith.index_cast %31 : i32 to index
    %c0_16 = arith.constant 0 : index
    %39 = vector.load %arg4[%c0_15, %38, %c0_16] : memref<1x16x128xf32, #tpu.memory_space<vmem>>, vector<1x16x128xf32>
    tpu.vector_store %arg4[%c0_15, %38, %c0_16], %37 {strides = array<i32>} : memref<1x16x128xf32, #tpu.memory_space<vmem>>, vector<1x16x128xf32>,
    %c1_i32_17 = arith.constant 1 : i32
    return
  }
  func.func @transform_0(%arg0: i32) -> (i32, i32, i32) {
    %c0_i32 = arith.constant 0 : i32
    %c0_i32_0 = arith.constant 0 : i32
    %c0_i32_1 = arith.constant 0 : i32
    return %arg0, %c0_i32, %c0_i32_0 : i32, i32, i32
  }
  func.func @transform_1(%arg0: i32) -> (i32, i32) {
    %c0_i32 = arith.constant 0 : i32
    %c0_i32_0 = arith.constant 0 : i32
    %c0_i32_1 = arith.constant 0 : i32
    return %c0_i32, %c0_i32_0 : i32, i32
  }
  func.func @transform_2(%arg0: i32) -> (i32, i32) {
    %c0_i32 = arith.constant 0 : i32
    %c0_i32_0 = arith.constant 0 : i32
    %c0_i32_1 = arith.constant 0 : i32
    return %c0_i32, %c0_i32_0 : i32, i32
  }
  func.func @transform_3(%arg0: i32) -> (i32, i32, i32) {
    %c0_i32 = arith.constant 0 : i32
    %c0_i32_0 = arith.constant 0 : i32
    %c0_i32_1 = arith.constant 0 : i32
    return %arg0, %c0_i32, %c0_i32_0 : i32, i32, i32
  }
}

</mosaic_0001>

<llo_original>
// kernel: tpu_custom_call.1
$region0: #{tpu_custom_call.1}
  #allocation0 [shape = 'u32[]', space=smem, size = 0x4, offset = 0x4, fixed_abs, tag = 'smem constant byte address 0x4 - core index']
  #allocation1 [shape = 'u32[72,128]{1,0:T(1,128)}', space=vmem, size = 0x9000, scoped, tag = 'internal scratch']
  %s0 = inlined_call_operand.hbm [shape: f32[2,16,128], index: 0, kind: input, shape index: {}]
  %s1 = inlined_call_operand.hbm [shape: f32[1,128], index: 1, kind: input, shape index: {}]
  %s2 = inlined_call_operand.vmem [shape: f32[1,128], index: 2, kind: input, shape index: {}]
  %s3 = inlined_call_operand.hbm [shape: f32[2,16,128], index: 3, kind: output, shape index: {}]
  %s4 = sld [smem:[#allocation0]]
  $region53: #{tpu_custom_call.1} parent=0
    _
  %s6 = ssub.s32 1, %s4
  %s7 = scalar_select 0, %s6, %s4
  $region1: #{tpu_custom_call.1} parent=0
    #allocation2 [shape = 'u8[16384]{0}', space=vmem, size = 0x4000, scoped, tag = 'input window, operand 0']
    #allocation3 [shape = 's32[2]{0}', space=sflag, size = 0x8, scoped, tag = 'scoped memory for tpu_custom_call.1']
    #allocation4 [shape = 's32[2]{0}', space=sflag, size = 0x8, scoped, tag = 'scoped memory for tpu_custom_call.1']
    #allocation5 [shape = 'u8[512]{0}', space=vmem, size = 0x400, scoped, tag = 'input window, operand 1, single buffered']
    #allocation6 [shape = 's32[1]{0}', space=sflag, size = 0x4, scoped, tag = 'scoped memory for tpu_custom_call.1']
    #allocation7 [shape = 'u8[16384]{0}', space=vmem, size = 0x4000, scoped, tag = 'output window, operand 0']
    %8 = vsyncpa [#allocation3], 0
    %s9 = scalar_lea.sflag [#allocation3], 1
    %10 = vsyncpa %s9, 0
    %11 = vsyncpa [#allocation6], 0
    %12 = vsyncpa [#allocation4], 0
    %s13 = scalar_lea.sflag [#allocation4], 1
    %14 = vsyncpa %s13, 0
    loop: start=0, step=1, limit=4
    $region2: #{tpu_custom_call.1} parent=1 // loop_pre_header
      _
    $region3: #{tpu_custom_call.1} parent=1 // loop_header
      %s16 = sphi 0, %s20
      %p17 = scmp.ge.s32.totalorder %s16, 4
      %s26 = sphi 0, %s28
      %s29 = sphi 0, %s26
      %s30 = sphi 0, %s29
      %s46 = sphi 0, %s30
      %s50 = sphi 0, %s50
      %s52 = sphi 0, %s50
      %s53 = sphi 0, %s52
      %s67 = sphi 0, %s53
      %s71 = sphi 0, %s71
      %s73 = sphi 0, %s71
      %s74 = sphi 0, %s73
      %s88 = sphi 0, %s74
      %s94 = sphi 0, %s96
      %s97 = sphi 0, %s94
      %s98 = sphi 0, %s97
      %s114 = sphi 0, %s98
    $region4: #{tpu_custom_call.1} parent=1 // loop_header_branch
      %19 = sbr.rel (%p17) target = $region8
    $region5: #{tpu_custom_call.1} parent=1 // loop_body
      %s21 = ssub.s32 %s16, 1
      %s22 = ssub.s32 %s16, 2
      %s23 = sadd.s32 %s16, 1
      %s24 = ssub.s32 %s16, %s23
      %p25 = scmp.eq.s32.totalorder %s24, 0
      %s27 = sadd.s32 %s26, 1
      %s28 = scalar_select %p25, %s26, %s27
      %p31 = pneg %p25
      %p32 = scmp.eq.s32.totalorder %s16, 1
      %p33 = por %p31, %p32
      %p34 = scmp.ne.s32.totalorder %s26, %s29
      %p35 = scmp.eq.s32.totalorder %s16, 0
      %p36 = por %p34, %p35
      %p37 = scmp.ne.s32.totalorder %s26, %s29
      %p38 = scmp.eq.s32.totalorder %s21, 1
      %p39 = por %p37, %p38
      %p40 = scmp.ne.s32.totalorder %s29, %s30
      %p41 = scmp.eq.s32.totalorder %s21, 0
      %p42 = por %p40, %p41
      %p43 = scmp.ne.s32.totalorder %s29, %s30
      %p44 = scmp.eq.s32.totalorder %s22, 1
      %p45 = por %p43, %p44
      %p47 = scmp.ne.s32.totalorder %s30, %s46
      %p48 = scmp.eq.s32.totalorder %s22, 0
      %p49 = por %p47, %p48
      %s51 = sadd.s32 %s50, 1
      %p54 = scmp.eq.s32.totalorder %s16, 1
      %p55 = scmp.ne.s32.totalorder %s50, %s52
      %p56 = scmp.eq.s32.totalorder %s16, 0
      %p57 = por %p55, %p56
      %p58 = scmp.ne.s32.totalorder %s50, %s52
      %p59 = scmp.eq.s32.totalorder %s21, 1
      %p60 = por %p58, %p59
      %p61 = scmp.ne.s32.totalorder %s52, %s53
      %p62 = scmp.eq.s32.totalorder %s21, 0
      %p63 = por %p61, %p62
      %p64 = scmp.ne.s32.totalorder %s52, %s53
      %p65 = scmp.eq.s32.totalorder %s22, 1
      %p66 = por %p64, %p65
      %p68 = scmp.ne.s32.totalorder %s53, %s67
      %p69 = scmp.eq.s32.totalorder %s22, 0
      %p70 = por %p68, %p69
      %s72 = sadd.s32 %s71, 1
      %p75 = scmp.eq.s32.totalorder %s16, 1
      %p76 = scmp.ne.s32.totalorder %s71, %s73
      %p77 = scmp.eq.s32.totalorder %s16, 0
      %p78 = por %p76, %p77
      %p79 = scmp.ne.s32.totalorder %s71, %s73
      %p80 = scmp.eq.s32.totalorder %s21, 1
      %p81 = por %p79, %p80
      %p82 = scmp.ne.s32.totalorder %s73, %s74
      %p83 = scmp.eq.s32.totalorder %s21, 0
      %p84 = por %p82, %p83
      %p85 = scmp.ne.s32.totalorder %s73, %s74
      %p86 = scmp.eq.s32.totalorder %s22, 1
      %p87 = por %p85, %p86
      %p89 = scmp.ne.s32.totalorder %s74, %s88
      %p90 = scmp.eq.s32.totalorder %s22, 0
      %p91 = por %p89, %p90
      %s92 = ssub.s32 %s16, %s23
      %p93 = scmp.eq.s32.totalorder %s92, 0
      %s95 = sadd.s32 %s94, 1
      %s96 = scalar_select %p93, %s94, %s95
      %p99 = pneg %p93
      %p100 = scmp.eq.s32.totalorder %s16, 1
      %p101 = por %p99, %p100
      %p102 = scmp.ne.s32.totalorder %s94, %s97
      %p103 = scmp.eq.s32.totalorder %s16, 0
      %p104 = por %p102, %p103
      %p105 = scmp.ne.s32.totalorder %s94, %s97
      %p106 = scmp.eq.s32.totalorder %s21, 1
      %p107 = por %p105, %p106
      %p108 = scmp.ne.s32.totalorder %s97, %s98
      %p109 = scmp.eq.s32.totalorder %s21, 0
      %p110 = por %p108, %p109
      %p111 = scmp.ne.s32.totalorder %s97, %s98
      %p112 = scmp.eq.s32.totalorder %s22, 1
      %p113 = por %p111, %p112
      %p115 = scmp.ne.s32.totalorder %s98, %s114
      %p116 = scmp.eq.s32.totalorder %s22, 0
      %p117 = por %p115, %p116
      %p118 = scmp.le.s32.totalorder 1, %s16
      %p119 = scmp.lt.s32.totalorder %s16, 3
      %p120 = pnand %p118, %p119
      %p121 = pneg %p120
      // Predicated region
      $region9: #{tpu_custom_call.1} parent=5 // pred_check
        _
      $region10: #{tpu_custom_call.1} parent=5 // pred_check_branch
        %123 = sbr.rel (%p120) target = $region12
      $region11: #{tpu_custom_call.1} parent=5 // pred_region
        %s124 = ssub.s32 %s16, 1
        // Predicated region
        $region13: #{tpu_custom_call.1} parent=11 // pred_check
          %p125 = pneg %p63
        $region14: #{tpu_custom_call.1} parent=11 // pred_check_branch
          %127 = sbr.rel (%p125) target = $region16
        $region15: #{tpu_custom_call.1} parent=11 // pred_region
          %129 = vsyncadd [#allocation6], 0
          %s131 = sshll.u32 %s1, 4
          %s132 = int_to_ptr.hbm [resolvable:$true] %s131
          %s133 = sshll.u32 [#allocation5], 4
          %s134 = int_to_ptr.vmem [resolvable:$true] %s133
          %136 = dma.hbm_to_vmem [thread:$0]  %s132, 16, %s134, [#allocation6]
        $region16: #{tpu_custom_call.1} parent=11 // pred_fallthru
          _
        // Predicated region
        $region17: #{tpu_custom_call.1} parent=11 // pred_check
          %p137 = pneg %p84
        $region18: #{tpu_custom_call.1} parent=11 // pred_check_branch
          %139 = sbr.rel (%p137) target = $region20
        $region19: #{tpu_custom_call.1} parent=11 // pred_region
          _
        $region20: #{tpu_custom_call.1} parent=11 // pred_fallthru
          _
      $region12: #{tpu_custom_call.1} parent=5 // pred_fallthru
        _
      %p140 = scmp.lt.s32.totalorder %s16, 2
      // Predicated region
      $region21: #{tpu_custom_call.1} parent=5 // pred_check
        %p141 = pneg %p140
      $region22: #{tpu_custom_call.1} parent=5 // pred_check_branch
        %143 = sbr.rel (%p141) target = $region24
      $region23: #{tpu_custom_call.1} parent=5 // pred_region
        // Predicated region
        $region25: #{tpu_custom_call.1} parent=23 // pred_check
          %p144 = pneg %p36
        $region26: #{tpu_custom_call.1} parent=23 // pred_check_branch
          %146 = sbr.rel (%p144) target = $region28
        $region27: #{tpu_custom_call.1} parent=23 // pred_region
          %s147 = sand.u32 %s26, 1
          %s148 = scalar_lea.sflag [#allocation3], %s147
          %s149 = sand.u32 %s26, 1
          %s150 = smul.addr %s149, 16
          %s151 = scalar_lea.vmem [#allocation2], %s150
          %153 = vsyncadd %s148, 0
          %s154 = smul.addr %s16, 2
          %s155 = smul.addr %s154, 8
          %s156 = scalar_lea.hbm %s0, %s155
          %s157 = sshll.u32 %s156, 4
          %s158 = int_to_ptr.hbm [resolvable:$true] %s157
          %s159 = sshll.u32 %s151, 4
          %s160 = int_to_ptr.vmem [resolvable:$true] %s159
          %165 = dma.hbm_to_vmem [thread:$0]  %s158, 256, %s160, %s148, 128, 128, 8
        $region28: #{tpu_custom_call.1} parent=23 // pred_fallthru
          _
      $region24: #{tpu_custom_call.1} parent=5 // pred_fallthru
        _
      %p166 = scmp.le.s32.totalorder 1, %s16
      %p167 = scmp.lt.s32.totalorder %s16, 3
      %p168 = pnand %p166, %p167
      %p169 = pneg %p168
      // Predicated region
      $region29: #{tpu_custom_call.1} parent=5 // pred_check
        _
      $region30: #{tpu_custom_call.1} parent=5 // pred_check_branch
        %171 = sbr.rel (%p168) target = $region32
      $region31: #{tpu_custom_call.1} parent=5 // pred_region
        %s172 = ssub.s32 %s16, 1
        %s173 = sand.u32 %s29, 1
        %s174 = scalar_lea.sflag [#allocation3], %s173
        %s175 = sand.u32 %s29, 1
        %s176 = smul.addr %s175, 16
        %s177 = scalar_lea.vmem [#allocation2], %s176
        // Predicated region
        $region33: #{tpu_custom_call.1} parent=31 // pred_check
          %p178 = pneg %p42
        $region34: #{tpu_custom_call.1} parent=31 // pred_check_branch
          %180 = sbr.rel (%p178) target = $region36
        $region35: #{tpu_custom_call.1} parent=31 // pred_region
          %182 = dma.done %s174, 256
        $region36: #{tpu_custom_call.1} parent=31 // pred_fallthru
          _
        // Predicated region
        $region37: #{tpu_custom_call.1} parent=31 // pred_check
          %p183 = pneg %p63
        $region38: #{tpu_custom_call.1} parent=31 // pred_check_branch
          %185 = sbr.rel (%p183) target = $region40
        $region39: #{tpu_custom_call.1} parent=31 // pred_region
          %187 = dma.done [#allocation6], 16
        $region40: #{tpu_custom_call.1} parent=31 // pred_fallthru
          _
        %s188 = sand.u32 %s29, 1
        %s189 = scalar_lea.sflag [#allocation3], %s188
        %s190 = sand.u32 %s29, 1
        %s191 = smul.addr %s190, 16
        %s192 = scalar_lea.vmem [#allocation2], %s191
        %p193 = pneg %p42
        %p194 = pneg %p39
        %p195 = pneg %p63
        %p196 = pneg %p60
        %p197 = pneg %p84
        %p198 = pneg %p81
        %p199 = pneg %p110
        %p200 = pneg %p107
        %s201 = sand.u32 %s97, 1
        %s202 = scalar_lea.sflag [#allocation4], %s201
        %s203 = sand.u32 %s97, 1
        %s204 = smul.addr %s203, 16
        %s205 = scalar_lea.vmem [#allocation7], %s204
        %v206 = vld [vmem:[#allocation5] sm:$0x1]
        %v207 = vld [vmem:[%s2] sm:$0x1]
        %v208 = vld [vmem:[%s177] sm:$0xff]
        %v209 = vld [vmem:[%s177 + $0x8] sm:$0xff]
        %v210 = vmul.f32 %v208, %v208
        %v211 = vmul.f32 %v209, %v209
        %v212 = vadd.f32 %v210, %v211
        %v213 = vrot.slane %v212, 4
        %v214 = vadd.f32 %v212, %v213
        %v215 = vrot.slane %v214, 2
        %v216 = vadd.f32 %v214, %v215
        %v217 = vrot.slane %v216, 1
        %v218 = vadd.f32 %v216, %v217
        %v219 = vadd.f32 %v218, 0.0
        %220 = vrot.lane.b32.xlu0 %v219, 64
        %v221 = vpop.permute.xlu0 %220
        %v222 = vadd.f32 %v219, %v221
        %223 = vrot.lane.b32.xlu0 %v222, 32
        %v224 = vpop.permute.xlu0 %223
        %v225 = vadd.f32 %v222, %v224
        %v226 = vrsqrt.pop %v225
        %v227 = vmul.f32 %v226, %v225
        %v228 = vmul.f32 %v227, %v226
        %v229 = vmul.f32 0.5, %v228
        %v230 = vsub.f32 1.5, %v229
        %v231 = vmul.f32 %v226, %v230
        %v232 = vmul.f32 %v225, %v231
        %vm233 = vcmp.eq.f32.partialorder %v225, inf
        %v234 = vsel %vm233, %v225, %v232
        %vm235 = vcmp.eq.f32.partialorder %v225, 0.0
        %v236 = vand.u32 %v225, 2147483648
        %v237 = vsel %vm235, %v236, %v234
        %vm238 = vcmask 1040384
        %v239 = vsel %vm238, %v237, 0.0
        %240 = vadd.xlane.f32.xlu0 %v239
        %v241 = vpop.xlane.xlu0 %240
        %v242 = vrcp.pop 128.0
        %v243 = vmul.f32 128.0, %v242
        %v244 = vsub.f32 1.0, %v243
        %v245 = vmul.f32 %v242, %v244
        %v246 = vadd.f32 %v242, %v245
        %vm247 = vweird.f32 %v242
        %v248 = vsel %vm247, %v242, %v246
        %v249 = vmul.f32 %v241, %v248
        %v250 = vadd.f32 %v249, 1e-06
        %v251 = vrcp.pop %v250
        %v252 = vmul.f32 %v250, %v251
        %v253 = vsub.f32 1.0, %v252
        %v254 = vmul.f32 %v251, %v253
        %v255 = vadd.f32 %v251, %v254
        %vm256 = vweird.f32 %v250
        %vm257 = vweird.f32 %v251
        %vm258 = vmor %vm256, %vm257
        %v259 = vsel %vm258, %v251, %v255
        %v260 = vand.u32 2147483647, %v250
        %vm261 = vcmp.eq.f32.partialorder %v260, 8.507059e+37
        %v262 = vand.u32 %v250, 2147483648
        %v263 = vor.u32 1.1754944e-38, %v262
        %v264 = vsel %vm261, %v263, %v259
        %v265 = vmul.f32 1.0, %v264
        %v266 = vmul.f32 %v237, %v265
        %v267 = vmul.f32 %v206, %v266
        %v268 = vadd.f32 %v267, 1.0
        %v270 = vperm.slane %v268, 0
        %v272 = vmul.f32 %v208, %v270
        %v273 = vmul.f32 %v209, %v270
        %v275 = vperm.slane %v207, 0
        %v277 = vadd.f32 %v272, %v275
        %v278 = vadd.f32 %v273, %v275
        %279 = vst [vmem:[%s205] sm:$0xff] %v277
        %280 = vst [vmem:[%s205 + $0x8] sm:$0xff] %v278
        %s281 = sand.u32 %s97, 1
        %s282 = scalar_lea.sflag [#allocation4], %s281
        %s283 = sand.u32 %s97, 1
        %s284 = smul.addr %s283, 16
        %s285 = scalar_lea.vmem [#allocation7], %s284
        // Predicated region
        $region41: #{tpu_custom_call.1} parent=31 // pred_check
          %p286 = pneg %p107
        $region42: #{tpu_custom_call.1} parent=31 // pred_check_branch
          %288 = sbr.rel (%p286) target = $region44
        $region43: #{tpu_custom_call.1} parent=31 // pred_region
          %290 = vsyncadd %s282, 0
          %s291 = smul.addr %s21, 2
          %s292 = smul.addr %s291, 8
          %s293 = scalar_lea.hbm %s3, %s292
          %s294 = sshll.u32 %s285, 4
          %s295 = int_to_ptr.vmem [resolvable:$true] %s294
          %s296 = sshll.u32 %s293, 4
          %s297 = int_to_ptr.hbm [resolvable:$true] %s296
          %302 = dma.vmem_to_hbm [thread:$0]  %s295, 256, %s297, %s282, 128, 128, 8
        $region44: #{tpu_custom_call.1} parent=31 // pred_fallthru
          _
      $region32: #{tpu_custom_call.1} parent=5 // pred_fallthru
        _
      %p303 = scmp.le.s32.totalorder 2, %s16
      // Predicated region
      $region45: #{tpu_custom_call.1} parent=5 // pred_check
        %p304 = pneg %p303
      $region46: #{tpu_custom_call.1} parent=5 // pred_check_branch
        %306 = sbr.rel (%p304) target = $region48
      $region47: #{tpu_custom_call.1} parent=5 // pred_region
        %s307 = ssub.s32 %s16, 2
        // Predicated region
        $region49: #{tpu_custom_call.1} parent=47 // pred_check
          %p308 = pneg %p113
        $region50: #{tpu_custom_call.1} parent=47 // pred_check_branch
          %310 = sbr.rel (%p308) target = $region52
        $region51: #{tpu_custom_call.1} parent=47 // pred_region
          %s311 = sand.u32 %s98, 1
          %s312 = scalar_lea.sflag [#allocation4], %s311
          %s313 = sand.u32 %s98, 1
          %s314 = smul.addr %s313, 16
          %s315 = scalar_lea.vmem [#allocation7], %s314
          %317 = dma.done %s312, 256
        $region52: #{tpu_custom_call.1} parent=47 // pred_fallthru
          _
      $region48: #{tpu_custom_call.1} parent=5 // pred_fallthru
        _
    $region6: #{tpu_custom_call.1} parent=1 // loop_footer
      %s20 = sadd.s32 1, %s16
    $region7: #{tpu_custom_call.1} parent=1 // loop_footer_branch
      %15 = sbr.rel target = $region3
    $region8: #{tpu_custom_call.1} parent=1 // loop_exit
      _
    %318 = vsyncpa [#allocation3], 1
    %s319 = scalar_lea.sflag [#allocation3], 1
    %320 = vsyncpa %s319, 1
    %321 = vsyncpa [#allocation6], 1
    %322 = vsyncpa [#allocation4], 1
    %s323 = scalar_lea.sflag [#allocation4], 1
    %324 = vsyncpa %s323, 1

</llo_original>
